<compile_context>
chip_gen: v5e
topology: v5e:2x2
jax: 0.10.0
libtpu: 0.0.40
codegen_flags: <defaults>
</compile_context>

<pallas_src>
import jax
import jax.numpy as jnp
from jax.experimental import pallas as pl
from jax.experimental.pallas import tpu as pltpu


def _round_up(n, m):
    return ((n + m - 1) // m) * m


def _make_kernel(num_layers, width, out_pad):
    """Kernel refs: (x, w_0 .. w_{L-1}, bias_pack, out).

    x:        (block_m, k_pad)  bf16
    w_l:      (in_l, out_l)     bf16 (VMEM resident)
    bias_pack:(num_layers, P)   f32  (VMEM resident, rows zero-padded)
    out:      (block_m, out_pad) f32 (lane-dense, out_pad multiple of 128)
    """

    def kernel(x_ref, *refs):
        o_ref = refs[-1]
        b_ref = refs[-2]
        w_refs = refs[:-2]

        b_all = b_ref[...]                      # tiny, loaded once
        h = x_ref[...]                          # bf16 activations

        # fc1 + (num_hidden_layers - 1) hidden layers: Linear + ReLU.
        for l in range(num_layers - 1):
            acc = jnp.dot(h, w_refs[l][...],
                          preferred_element_type=jnp.float32)   # MXU, f32 acc
            acc = acc + b_all[l:l + 1, :width]                   # f32 bias add
            h = jnp.maximum(acc, 0.0).astype(jnp.bfloat16)       # ReLU + bf16

        # Final linear (scale already folded into w/b at prep time).
        acc = jnp.dot(h, w_refs[-1][...], preferred_element_type=jnp.float32)
        o_ref[...] = acc + b_all[num_layers - 1:num_layers, :out_pad]

    return kernel


def init_params(key, *, input_size, width, num_hidden_layers, output_size):
    """Matches MLPGeneral.init_weights: weights ~ N(0,1), biases = 0.

    Weights stored as (in_features, out_features) so the kernel computes x @ W,
    equivalent to PyTorch's x @ W.T with W of shape (out, in).
    """
    dims = [input_size] + [width] * num_hidden_layers + [output_size]
    params = []
    for i in range(len(dims) - 1):
        key, sub = jax.random.split(key)
        w = jax.random.normal(sub, (dims[i], dims[i + 1]), dtype=jnp.float32)
        b = jnp.zeros((dims[i + 1],), dtype=jnp.float32)
        params.append(w)
        params.append(b)
    return params


def prepare_params(params, *, input_size, width, num_hidden_layers, output_size):
    """One-time parameter transform for the kernel:
       - zero-pad first-layer K to a multiple of 128,
       - zero-pad final-layer output lanes to a multiple of 128,
       - fold the static output scale into the final weight/bias,
       - cast weights to bf16, pack all biases into one f32 array."""
    scale = float(input_size ** (-0.5) * (width ** num_hidden_layers) ** (-0.5))
    k_pad = _round_up(input_size, 128)
    out_pad = _round_up(output_size, 128)
    num_layers = num_hidden_layers + 1

    weights = [params[2 * i] for i in range(num_layers)]
    biases = [params[2 * i + 1].reshape(-1) for i in range(num_layers)]

    # Pad first-layer contraction dim (rows of w0) to k_pad.
    weights[0] = jnp.pad(weights[0], ((0, k_pad - input_size), (0, 0)))

    # Fold scale into the final layer and pad its output lanes.
    wf = weights[-1] * scale
    weights[-1] = jnp.pad(wf, ((0, 0), (0, out_pad - output_size)))
    bf = biases[-1] * scale
    biases[-1] = jnp.pad(bf, (0, out_pad - output_size))

    weights_bf16 = [w.astype(jnp.bfloat16) for w in weights]

    bias_width = max(width, out_pad)
    bias_pack = jnp.zeros((num_layers, bias_width), dtype=jnp.float32)
    for i, b in enumerate(biases):
        bias_pack = bias_pack.at[i, : b.shape[0]].set(b)

    return weights_bf16, bias_pack, k_pad, out_pad


def mlp_general_forward(x, prepared, *, input_size, width, num_hidden_layers,
                        output_size, block_m=256):
    """Run the MLPGeneral forward pass via a batch-tiled pallas_call.

    x: (B, ...) float32 — non-batch dims are flattened to input_size.
    prepared: output of prepare_params().
    """
    weights, bias_pack, k_pad, out_pad = prepared
    num_layers = num_hidden_layers + 1

    B = x.shape[0]
    x2 = x.reshape(B, -1)
    assert x2.shape[1] == input_size, (x2.shape, input_size)

    b_pad = _round_up(B, block_m)
    x2 = jnp.pad(x2, ((0, b_pad - B), (0, k_pad - input_size)))
    x2 = x2.astype(jnp.bfloat16)   # halves x-tile DMA; MXU wants bf16 anyway

    grid = (b_pad // block_m,)

    in_specs = [pl.BlockSpec((block_m, k_pad), lambda i: (i, 0))]
    # Weights / biases: full-array blocks with constant index_map -> resident.
    in_specs += [pl.BlockSpec(w.shape, lambda i: (0, 0)) for w in weights]
    in_specs += [pl.BlockSpec(bias_pack.shape, lambda i: (0, 0))]
    out_specs = pl.BlockSpec((block_m, out_pad), lambda i: (i, 0))

    # Explicit VMEM budget: resident params + double-buffered x/out tiles
    # + activation/temporary headroom, clamped to sane per-generation limits.
    resident = sum(w.size * 2 for w in weights) + bias_pack.size * 4
    streamed = 2 * (block_m * k_pad * 2 + block_m * out_pad * 4)
    act = block_m * max(width, out_pad) * 4
    vmem_limit = int(min(max(resident + streamed + 8 * act + (4 << 20),
                             16 << 20), 48 << 20))

    kernel = _make_kernel(num_layers, width, out_pad)

    out = pl.pallas_call(
        kernel,
        out_shape=jax.ShapeDtypeStruct((b_pad, out_pad), jnp.float32),
        grid=grid,
        in_specs=in_specs,
        out_specs=out_specs,
        compiler_params=pltpu.CompilerParams(
            dimension_semantics=("parallel",),
            vmem_limit_bytes=vmem_limit,
        ),
    )(x2, *weights, bias_pack)

    return out[:B, :output_size]


def reference_forward(x, params, *, input_size, width, num_hidden_layers):
    """Pure-JAX f32 reference matching the PyTorch module exactly."""
    B = x.shape[0]
    h = x.reshape(B, -1)
    num_layers = num_hidden_layers + 1
    for l in range(num_layers - 1):
        w, b = params[2 * l], params[2 * l + 1]
        h = jnp.maximum(h @ w + b, 0.0)
    wf, bf = params[-2], params[-1]
    logits = h @ wf + bf
    logits = logits * (input_size ** (-0.5))
    logits = logits * ((width ** num_hidden_layers) ** (-0.5))
    return logits


if __name__ == "__main__":
    # Small config: input is (B, 8, 8) -> flattened to input_size=64.
    # B=300 is deliberately not a multiple of block_m to exercise padding.
    B = 300
    INPUT_SIZE = 64
    WIDTH = 128
    NUM_HIDDEN_LAYERS = 3
    OUTPUT_SIZE = 1
    BLOCK_M = 256

    key = jax.random.PRNGKey(0)
    key, xk = jax.random.split(key)
    x = jax.random.normal(xk, (B, 8, 8), dtype=jnp.float32)

    params = init_params(
        key,
        input_size=INPUT_SIZE,
        width=WIDTH,
        num_hidden_layers=NUM_HIDDEN_LAYERS,
        output_size=OUTPUT_SIZE,
    )
    prepared = prepare_params(
        params,
        input_size=INPUT_SIZE,
        width=WIDTH,
        num_hidden_layers=NUM_HIDDEN_LAYERS,
        output_size=OUTPUT_SIZE,
    )

    out = mlp_general_forward(
        x, prepared,
        input_size=INPUT_SIZE,
        width=WIDTH,
        num_hidden_layers=NUM_HIDDEN_LAYERS,
        output_size=OUTPUT_SIZE,
        block_m=BLOCK_M,
    )
    out = jax.block_until_ready(out)

    ref = reference_forward(
        x, params,
        input_size=INPUT_SIZE,
        width=WIDTH,
        num_hidden_layers=NUM_HIDDEN_LAYERS,
    )
    ref = jax.block_until_ready(ref)

    assert out.shape == (B, OUTPUT_SIZE), out.shape
    # bf16 MXU path with f32 accumulation -> loosened tolerance vs f32 reference.
    assert jnp.allclose(out, ref, rtol=5e-2, atol=5e-2), (
        f"max abs err {jnp.max(jnp.abs(out - ref))}"
    )

    print("KERNEL_OK")
</pallas_src>

<mosaic_0001>
module attributes {stable_mosaic.version = 11 : i64} {
  func.func @kernel(%arg0: i32, %arg1: memref<256x128xbf16, #tpu.memory_space<vmem>>, %arg2: memref<128x128xbf16, #tpu.memory_space<vmem>>, %arg3: memref<128x128xbf16, #tpu.memory_space<vmem>>, %arg4: memref<128x128xbf16, #tpu.memory_space<vmem>>, %arg5: memref<128x128xbf16, #tpu.memory_space<vmem>>, %arg6: memref<4x128xf32, #tpu.memory_space<vmem>>, %arg7: memref<256x128xf32, #tpu.memory_space<vmem>>) attributes {dimension_semantics = [#tpu.dimension_semantics<parallel>], iteration_bounds = array<i64: 2>, scalar_prefetch = 0 : i64, scratch_operands = 0 : i64, tpu.core_type = #tpu.core_type<tc>, window_params = [{transform_indices = @transform_0, window_bounds = array<i64: 256, 128>}, {pipeline_mode = #tpu.pipeline_mode<synchronous>, transform_indices = @transform_1, window_bounds = array<i64: 128, 128>}, {pipeline_mode = #tpu.pipeline_mode<synchronous>, transform_indices = @transform_2, window_bounds = array<i64: 128, 128>}, {pipeline_mode = #tpu.pipeline_mode<synchronous>, transform_indices = @transform_3, window_bounds = array<i64: 128, 128>}, {pipeline_mode = #tpu.pipeline_mode<synchronous>, transform_indices = @transform_4, window_bounds = array<i64: 128, 128>}, {pipeline_mode = #tpu.pipeline_mode<synchronous>, transform_indices = @transform_5, window_bounds = array<i64: 4, 128>}, {transform_indices = @transform_6, window_bounds = array<i64: 256, 128>}]} {
    %c0 = arith.constant 0 : index
    %c0_0 = arith.constant 0 : index
    %0 = vector.load %arg6[%c0, %c0_0] : memref<4x128xf32, #tpu.memory_space<vmem>>, vector<4x128xf32>
    %c0_1 = arith.constant 0 : index
    %c0_2 = arith.constant 0 : index
    %1 = vector.load %arg1[%c0_1, %c0_2] : memref<256x128xbf16, #tpu.memory_space<vmem>>, vector<256x128xbf16>
    %c0_3 = arith.constant 0 : index
    %c0_4 = arith.constant 0 : index
    %2 = vector.load %arg2[%c0_3, %c0_4] : memref<128x128xbf16, #tpu.memory_space<vmem>>, vector<128x128xbf16>
    %cst = arith.constant dense<0.000000e+00> : vector<256x128xf32>
    %3 = tpu.matmul %1, %2, %cst {dimension_numbers = #tpu.dot_dimension_numbers<[1], [0], [0], [1], [0, 0, 1, 1], [], []>} : vector<256x128xbf16>, vector<128x128xbf16>, vector<256x128xf32> -> vector<256x128xf32>
    %4 = vector.extract_strided_slice %0 {offsets = [0, 0], sizes = [1, 128], strides = [1, 1]} : vector<4x128xf32> to vector<1x128xf32>
    %5 = vector.broadcast %4 : vector<1x128xf32> to vector<256x128xf32>
    %6 = arith.addf %3, %5 : vector<256x128xf32>
    %cst_5 = arith.constant 0.000000e+00 : f32
    %7 = vector.broadcast %cst_5 : f32 to vector<256x128xf32>
    %8 = arith.maximumf %6, %7 : vector<256x128xf32>
    %9 = arith.truncf %8 : vector<256x128xf32> to vector<256x128xbf16>
    %c0_6 = arith.constant 0 : index
    %c0_7 = arith.constant 0 : index
    %10 = vector.load %arg3[%c0_6, %c0_7] : memref<128x128xbf16, #tpu.memory_space<vmem>>, vector<128x128xbf16>
    %cst_8 = arith.constant dense<0.000000e+00> : vector<256x128xf32>
    %11 = tpu.matmul %9, %10, %cst_8 {dimension_numbers = #tpu.dot_dimension_numbers<[1], [0], [0], [1], [0, 0, 1, 1], [], []>} : vector<256x128xbf16>, vector<128x128xbf16>, vector<256x128xf32> -> vector<256x128xf32>
    %12 = vector.extract_strided_slice %0 {offsets = [1, 0], sizes = [1, 128], strides = [1, 1]} : vector<4x128xf32> to vector<1x128xf32>
    %13 = vector.broadcast %12 : vector<1x128xf32> to vector<256x128xf32>
    %14 = arith.addf %11, %13 : vector<256x128xf32>
    %cst_9 = arith.constant 0.000000e+00 : f32
    %15 = vector.broadcast %cst_9 : f32 to vector<256x128xf32>
    %16 = arith.maximumf %14, %15 : vector<256x128xf32>
    %17 = arith.truncf %16 : vector<256x128xf32> to vector<256x128xbf16>
    %c0_10 = arith.constant 0 : index
    %c0_11 = arith.constant 0 : index
    %18 = vector.load %arg4[%c0_10, %c0_11] : memref<128x128xbf16, #tpu.memory_space<vmem>>, vector<128x128xbf16>
    %cst_12 = arith.constant dense<0.000000e+00> : vector<256x128xf32>
    %19 = tpu.matmul %17, %18, %cst_12 {dimension_numbers = #tpu.dot_dimension_numbers<[1], [0], [0], [1], [0, 0, 1, 1], [], []>} : vector<256x128xbf16>, vector<128x128xbf16>, vector<256x128xf32> -> vector<256x128xf32>
    %20 = vector.extract_strided_slice %0 {offsets = [2, 0], sizes = [1, 128], strides = [1, 1]} : vector<4x128xf32> to vector<1x128xf32>
    %21 = vector.broadcast %20 : vector<1x128xf32> to vector<256x128xf32>
    %22 = arith.addf %19, %21 : vector<256x128xf32>
    %cst_13 = arith.constant 0.000000e+00 : f32
    %23 = vector.broadcast %cst_13 : f32 to vector<256x128xf32>
    %24 = arith.maximumf %22, %23 : vector<256x128xf32>
    %25 = arith.truncf %24 : vector<256x128xf32> to vector<256x128xbf16>
    %c0_14 = arith.constant 0 : index
    %c0_15 = arith.constant 0 : index
    %26 = vector.load %arg5[%c0_14, %c0_15] : memref<128x128xbf16, #tpu.memory_space<vmem>>, vector<128x128xbf16>
    %cst_16 = arith.constant dense<0.000000e+00> : vector<256x128xf32>
    %27 = tpu.matmul %25, %26, %cst_16 {dimension_numbers = #tpu.dot_dimension_numbers<[1], [0], [0], [1], [0, 0, 1, 1], [], []>} : vector<256x128xbf16>, vector<128x128xbf16>, vector<256x128xf32> -> vector<256x128xf32>
    %28 = vector.extract_strided_slice %0 {offsets = [3, 0], sizes = [1, 128], strides = [1, 1]} : vector<4x128xf32> to vector<1x128xf32>
    %29 = vector.broadcast %28 : vector<1x128xf32> to vector<256x128xf32>
    %30 = arith.addf %27, %29 : vector<256x128xf32>
    %c0_17 = arith.constant 0 : index
    %c0_18 = arith.constant 0 : index
    %31 = vector.load %arg7[%c0_17, %c0_18] : memref<256x128xf32, #tpu.memory_space<vmem>>, vector<256x128xf32>
    tpu.vector_store %arg7[%c0_17, %c0_18], %30 {strides = array<i32>} : memref<256x128xf32, #tpu.memory_space<vmem>>, vector<256x128xf32>,
    return
  }
  func.func @transform_0(%arg0: i32) -> (i32, i32) {
    %c0_i32 = arith.constant 0 : i32
    %c0_i32_0 = arith.constant 0 : i32
    return %arg0, %c0_i32 : i32, i32
  }
  func.func @transform_1(%arg0: i32) -> (i32, i32) {
    %c0_i32 = arith.constant 0 : i32
    %c0_i32_0 = arith.constant 0 : i32
    %c0_i32_1 = arith.constant 0 : i32
    return %c0_i32, %c0_i32_0 : i32, i32
  }
  func.func @transform_2(%arg0: i32) -> (i32, i32) {
    %c0_i32 = arith.constant 0 : i32
    %c0_i32_0 = arith.constant 0 : i32
    %c0_i32_1 = arith.constant 0 : i32
    return %c0_i32, %c0_i32_0 : i32, i32
  }
  func.func @transform_3(%arg0: i32) -> (i32, i32) {
    %c0_i32 = arith.constant 0 : i32
    %c0_i32_0 = arith.constant 0 : i32
    %c0_i32_1 = arith.constant 0 : i32
    return %c0_i32, %c0_i32_0 : i32, i32
  }
  func.func @transform_4(%arg0: i32) -> (i32, i32) {
    %c0_i32 = arith.constant 0 : i32
    %c0_i32_0 = arith.constant 0 : i32
    %c0_i32_1 = arith.constant 0 : i32
    return %c0_i32, %c0_i32_0 : i32, i32
  }
  func.func @transform_5(%arg0: i32) -> (i32, i32) {
    %c0_i32 = arith.constant 0 : i32
    %c0_i32_0 = arith.constant 0 : i32
    %c0_i32_1 = arith.constant 0 : i32
    return %c0_i32, %c0_i32_0 : i32, i32
  }
  func.func @transform_6(%arg0: i32) -> (i32, i32) {
    %c0_i32 = arith.constant 0 : i32
    %c0_i32_0 = arith.constant 0 : i32
    return %arg0, %c0_i32 : i32, i32
  }
}

</mosaic_0001>

<llo_original>
// kernel: tpu_custom_call.1
$region0: #{tpu_custom_call.1}
  #allocation0 [shape = 'u32[]', space=smem, size = 0x4, offset = 0x4, fixed_abs, tag = 'smem constant byte address 0x4 - core index']
  #allocation1 [shape = 'u32[72,128]{1,0:T(1,128)}', space=vmem, size = 0x9000, scoped, tag = 'internal scratch']
  %s0 = inlined_call_operand.hbm [shape: bf16[512,128], index: 0, kind: input, shape index: {}]
  %s1 = inlined_call_operand.hbm [shape: bf16[128,128], index: 1, kind: input, shape index: {}]
  %s2 = inlined_call_operand.hbm [shape: bf16[128,128], index: 2, kind: input, shape index: {}]
  %s3 = inlined_call_operand.hbm [shape: bf16[128,128], index: 3, kind: input, shape index: {}]
  %s4 = inlined_call_operand.hbm [shape: bf16[128,128], index: 4, kind: input, shape index: {}]
  %s5 = inlined_call_operand.vmem [shape: f32[4,128], index: 5, kind: input, shape index: {}]
  %s6 = inlined_call_operand.hbm [shape: f32[512,128], index: 6, kind: output, shape index: {}]
  %s7 = sld [smem:[#allocation0]]
  $region77: #{tpu_custom_call.1} parent=0
    _
  %s9 = ssub.s32 1, %s7
  %s10 = scalar_select 0, %s9, %s7
  $region1: #{tpu_custom_call.1} parent=0
    #allocation2 [shape = 'u8[131072]{0}', space=vmem, size = 0x20000, scoped, tag = 'input window, operand 0']
    #allocation3 [shape = 's32[2]{0}', space=sflag, size = 0x8, scoped, tag = 'scoped memory for tpu_custom_call.1']
    #allocation4 [shape = 's32[2]{0}', space=sflag, size = 0x8, scoped, tag = 'scoped memory for tpu_custom_call.1']
    #allocation5 [shape = 'u8[32768]{0}', space=vmem, size = 0x8000, scoped, tag = 'input window, operand 1, single buffered']
    #allocation6 [shape = 's32[1]{0}', space=sflag, size = 0x4, scoped, tag = 'scoped memory for tpu_custom_call.1']
    #allocation7 [shape = 'u8[32768]{0}', space=vmem, size = 0x8000, scoped, tag = 'input window, operand 2, single buffered']
    #allocation8 [shape = 'u8[32768]{0}', space=vmem, size = 0x8000, scoped, tag = 'input window, operand 3, single buffered']
    #allocation9 [shape = 's32[1]{0}', space=sflag, size = 0x4, scoped, tag = 'scoped memory for tpu_custom_call.1']
    #allocation10 [shape = 'u8[32768]{0}', space=vmem, size = 0x8000, scoped, tag = 'input window, operand 4, single buffered']
    #allocation11 [shape = 'u8[262144]{0}', space=vmem, size = 0x40000, scoped, tag = 'output window, operand 0']
    %11 = vsyncpa [#allocation3], 0
    %s12 = scalar_lea.sflag [#allocation3], 1
    %13 = vsyncpa %s12, 0
    %14 = vsyncpa [#allocation6], 0
    %15 = vsyncpa [#allocation9], 0
    %16 = vsyncpa [#allocation4], 0
    %s17 = scalar_lea.sflag [#allocation4], 1
    %18 = vsyncpa %s17, 0
    loop: start=0, step=1, limit=4
    $region2: #{tpu_custom_call.1} parent=1 // loop_pre_header
      _
    $region3: #{tpu_custom_call.1} parent=1 // loop_header
      %s20 = sphi 0, %s24
      %p21 = scmp.ge.s32.totalorder %s20, 4
      %s30 = sphi 0, %s32
      %s33 = sphi 0, %s30
      %s34 = sphi 0, %s33
      %s50 = sphi 0, %s34
      %s54 = sphi 0, %s54
      %s56 = sphi 0, %s54
      %s57 = sphi 0, %s56
      %s71 = sphi 0, %s57
      %s75 = sphi 0, %s75
      %s77 = sphi 0, %s75
      %s78 = sphi 0, %s77
      %s92 = sphi 0, %s78
      %s96 = sphi 0, %s96
      %s98 = sphi 0, %s96
      %s99 = sphi 0, %s98
      %s113 = sphi 0, %s99
      %s117 = sphi 0, %s117
      %s119 = sphi 0, %s117
      %s120 = sphi 0, %s119
      %s134 = sphi 0, %s120
      %s138 = sphi 0, %s138
      %s140 = sphi 0, %s138
      %s141 = sphi 0, %s140
      %s155 = sphi 0, %s141
      %s161 = sphi 0, %s163
      %s164 = sphi 0, %s161
      %s165 = sphi 0, %s164
      %s181 = sphi 0, %s165
    $region4: #{tpu_custom_call.1} parent=1 // loop_header_branch
      %23 = sbr.rel (%p21) target = $region8
    $region5: #{tpu_custom_call.1} parent=1 // loop_body
      %s25 = ssub.s32 %s20, 1
      %s26 = ssub.s32 %s20, 2
      %s27 = sadd.s32 %s20, 1
      %s28 = ssub.s32 %s20, %s27
      %p29 = scmp.eq.s32.totalorder %s28, 0
      %s31 = sadd.s32 %s30, 1
      %s32 = scalar_select %p29, %s30, %s31
      %p35 = pneg %p29
      %p36 = scmp.eq.s32.totalorder %s20, 1
      %p37 = por %p35, %p36
      %p38 = scmp.ne.s32.totalorder %s30, %s33
      %p39 = scmp.eq.s32.totalorder %s20, 0
      %p40 = por %p38, %p39
      %p41 = scmp.ne.s32.totalorder %s30, %s33
      %p42 = scmp.eq.s32.totalorder %s25, 1
      %p43 = por %p41, %p42
      %p44 = scmp.ne.s32.totalorder %s33, %s34
      %p45 = scmp.eq.s32.totalorder %s25, 0
      %p46 = por %p44, %p45
      %p47 = scmp.ne.s32.totalorder %s33, %s34
      %p48 = scmp.eq.s32.totalorder %s26, 1
      %p49 = por %p47, %p48
      %p51 = scmp.ne.s32.totalorder %s34, %s50
      %p52 = scmp.eq.s32.totalorder %s26, 0
      %p53 = por %p51, %p52
      %s55 = sadd.s32 %s54, 1
      %p58 = scmp.eq.s32.totalorder %s20, 1
      %p59 = scmp.ne.s32.totalorder %s54, %s56
      %p60 = scmp.eq.s32.totalorder %s20, 0
      %p61 = por %p59, %p60
      %p62 = scmp.ne.s32.totalorder %s54, %s56
      %p63 = scmp.eq.s32.totalorder %s25, 1
      %p64 = por %p62, %p63
      %p65 = scmp.ne.s32.totalorder %s56, %s57
      %p66 = scmp.eq.s32.totalorder %s25, 0
      %p67 = por %p65, %p66
      %p68 = scmp.ne.s32.totalorder %s56, %s57
      %p69 = scmp.eq.s32.totalorder %s26, 1
      %p70 = por %p68, %p69
      %p72 = scmp.ne.s32.totalorder %s57, %s71
      %p73 = scmp.eq.s32.totalorder %s26, 0
      %p74 = por %p72, %p73
      %s76 = sadd.s32 %s75, 1
      %p79 = scmp.eq.s32.totalorder %s20, 1
      %p80 = scmp.ne.s32.totalorder %s75, %s77
      %p81 = scmp.eq.s32.totalorder %s20, 0
      %p82 = por %p80, %p81
      %p83 = scmp.ne.s32.totalorder %s75, %s77
      %p84 = scmp.eq.s32.totalorder %s25, 1
      %p85 = por %p83, %p84
      %p86 = scmp.ne.s32.totalorder %s77, %s78
      %p87 = scmp.eq.s32.totalorder %s25, 0
      %p88 = por %p86, %p87
      %p89 = scmp.ne.s32.totalorder %s77, %s78
      %p90 = scmp.eq.s32.totalorder %s26, 1
      %p91 = por %p89, %p90
      %p93 = scmp.ne.s32.totalorder %s78, %s92
      %p94 = scmp.eq.s32.totalorder %s26, 0
      %p95 = por %p93, %p94
      %s97 = sadd.s32 %s96, 1
      %p100 = scmp.eq.s32.totalorder %s20, 1
      %p101 = scmp.ne.s32.totalorder %s96, %s98
      %p102 = scmp.eq.s32.totalorder %s20, 0
      %p103 = por %p101, %p102
      %p104 = scmp.ne.s32.totalorder %s96, %s98
      %p105 = scmp.eq.s32.totalorder %s25, 1
      %p106 = por %p104, %p105
      %p107 = scmp.ne.s32.totalorder %s98, %s99
      %p108 = scmp.eq.s32.totalorder %s25, 0
      %p109 = por %p107, %p108
      %p110 = scmp.ne.s32.totalorder %s98, %s99
      %p111 = scmp.eq.s32.totalorder %s26, 1
      %p112 = por %p110, %p111
      %p114 = scmp.ne.s32.totalorder %s99, %s113
      %p115 = scmp.eq.s32.totalorder %s26, 0
      %p116 = por %p114, %p115
      %s118 = sadd.s32 %s117, 1
      %p121 = scmp.eq.s32.totalorder %s20, 1
      %p122 = scmp.ne.s32.totalorder %s117, %s119
      %p123 = scmp.eq.s32.totalorder %s20, 0
      %p124 = por %p122, %p123
      %p125 = scmp.ne.s32.totalorder %s117, %s119
      %p126 = scmp.eq.s32.totalorder %s25, 1
      %p127 = por %p125, %p126
      %p128 = scmp.ne.s32.totalorder %s119, %s120
      %p129 = scmp.eq.s32.totalorder %s25, 0
      %p130 = por %p128, %p129
      %p131 = scmp.ne.s32.totalorder %s119, %s120
      %p132 = scmp.eq.s32.totalorder %s26, 1
      %p133 = por %p131, %p132
      %p135 = scmp.ne.s32.totalorder %s120, %s134
      %p136 = scmp.eq.s32.totalorder %s26, 0
      %p137 = por %p135, %p136
      %s139 = sadd.s32 %s138, 1
      %p142 = scmp.eq.s32.totalorder %s20, 1
      %p143 = scmp.ne.s32.totalorder %s138, %s140
      %p144 = scmp.eq.s32.totalorder %s20, 0
      %p145 = por %p143, %p144
      %p146 = scmp.ne.s32.totalorder %s138, %s140
      %p147 = scmp.eq.s32.totalorder %s25, 1
      %p148 = por %p146, %p147
      %p149 = scmp.ne.s32.totalorder %s140, %s141
      %p150 = scmp.eq.s32.totalorder %s25, 0
      %p151 = por %p149, %p150
      %p152 = scmp.ne.s32.totalorder %s140, %s141
      %p153 = scmp.eq.s32.totalorder %s26, 1
      %p154 = por %p152, %p153
      %p156 = scmp.ne.s32.totalorder %s141, %s155
      %p157 = scmp.eq.s32.totalorder %s26, 0
      %p158 = por %p156, %p157
      %s159 = ssub.s32 %s20, %s27
      %p160 = scmp.eq.s32.totalorder %s159, 0
      %s162 = sadd.s32 %s161, 1
      %s163 = scalar_select %p160, %s161, %s162
      %p166 = pneg %p160
      %p167 = scmp.eq.s32.totalorder %s20, 1
      %p168 = por %p166, %p167
      %p169 = scmp.ne.s32.totalorder %s161, %s164
      %p170 = scmp.eq.s32.totalorder %s20, 0
      %p171 = por %p169, %p170
      %p172 = scmp.ne.s32.totalorder %s161, %s164
      %p173 = scmp.eq.s32.totalorder %s25, 1
      %p174 = por %p172, %p173
      %p175 = scmp.ne.s32.totalorder %s164, %s165
      %p176 = scmp.eq.s32.totalorder %s25, 0
      %p177 = por %p175, %p176
      %p178 = scmp.ne.s32.totalorder %s164, %s165
      %p179 = scmp.eq.s32.totalorder %s26, 1
      %p180 = por %p178, %p179
      %p182 = scmp.ne.s32.totalorder %s165, %s181
      %p183 = scmp.eq.s32.totalorder %s26, 0
      %p184 = por %p182, %p183
      %p185 = scmp.le.s32.totalorder 1, %s20
      %p186 = scmp.lt.s32.totalorder %s20, 3
      %p187 = pnand %p185, %p186
      %p188 = pneg %p187
      // Predicated region
      $region9: #{tpu_custom_call.1} parent=5 // pred_check
        _
      $region10: #{tpu_custom_call.1} parent=5 // pred_check_branch
        %190 = sbr.rel (%p187) target = $region12
      $region11: #{tpu_custom_call.1} parent=5 // pred_region
        %s191 = ssub.s32 %s20, 1
        // Predicated region
        $region13: #{tpu_custom_call.1} parent=11 // pred_check
          %p192 = pneg %p67
        $region14: #{tpu_custom_call.1} parent=11 // pred_check_branch
          %194 = sbr.rel (%p192) target = $region16
        $region15: #{tpu_custom_call.1} parent=11 // pred_region
          %196 = vsyncadd [#allocation6], 0
          %s197 = sshll.u32 %s1, 4
          %s198 = int_to_ptr.hbm [resolvable:$true] %s197
          %s199 = sshll.u32 [#allocation5], 4
          %s200 = int_to_ptr.vmem [resolvable:$true] %s199
          %205 = dma.hbm_to_vmem [thread:$0]  %s198, 1024, %s200, [#allocation6], 64, 64, 4
        $region16: #{tpu_custom_call.1} parent=11 // pred_fallthru
          _
        // Predicated region
        $region17: #{tpu_custom_call.1} parent=11 // pred_check
          %p206 = pneg %p88
        $region18: #{tpu_custom_call.1} parent=11 // pred_check_branch
          %208 = sbr.rel (%p206) target = $region20
        $region19: #{tpu_custom_call.1} parent=11 // pred_region
          %210 = vsyncadd [#allocation6], 0
          %s211 = sshll.u32 %s2, 4
          %s212 = int_to_ptr.hbm [resolvable:$true] %s211
          %s213 = sshll.u32 [#allocation7], 4
          %s214 = int_to_ptr.vmem [resolvable:$true] %s213
          %219 = dma.hbm_to_vmem [thread:$0]  %s212, 1024, %s214, [#allocation6], 64, 64, 4
        $region20: #{tpu_custom_call.1} parent=11 // pred_fallthru
          _
        // Predicated region
        $region21: #{tpu_custom_call.1} parent=11 // pred_check
          %p220 = pneg %p109
        $region22: #{tpu_custom_call.1} parent=11 // pred_check_branch
          %222 = sbr.rel (%p220) target = $region24
        $region23: #{tpu_custom_call.1} parent=11 // pred_region
          %224 = vsyncadd [#allocation9], 0
          %s225 = sshll.u32 %s3, 4
          %s226 = int_to_ptr.hbm [resolvable:$true] %s225
          %s227 = sshll.u32 [#allocation8], 4
          %s228 = int_to_ptr.vmem [resolvable:$true] %s227
          %233 = dma.hbm_to_vmem [thread:$0]  %s226, 1024, %s228, [#allocation9], 64, 64, 4
        $region24: #{tpu_custom_call.1} parent=11 // pred_fallthru
          _
        // Predicated region
        $region25: #{tpu_custom_call.1} parent=11 // pred_check
          %p234 = pneg %p130
        $region26: #{tpu_custom_call.1} parent=11 // pred_check_branch
          %236 = sbr.rel (%p234) target = $region28
        $region27: #{tpu_custom_call.1} parent=11 // pred_region
          %238 = vsyncadd [#allocation9], 0
          %s239 = sshll.u32 %s4, 4
          %s240 = int_to_ptr.hbm [resolvable:$true] %s239
          %s241 = sshll.u32 [#allocation10], 4
          %s242 = int_to_ptr.vmem [resolvable:$true] %s241
          %247 = dma.hbm_to_vmem [thread:$0]  %s240, 1024, %s242, [#allocation9], 64, 64, 4
        $region28: #{tpu_custom_call.1} parent=11 // pred_fallthru
          _
        // Predicated region
        $region29: #{tpu_custom_call.1} parent=11 // pred_check
          %p248 = pneg %p151
        $region30: #{tpu_custom_call.1} parent=11 // pred_check_branch
          %250 = sbr.rel (%p248) target = $region32
        $region31: #{tpu_custom_call.1} parent=11 // pred_region
          _
        $region32: #{tpu_custom_call.1} parent=11 // pred_fallthru
          _
      $region12: #{tpu_custom_call.1} parent=5 // pred_fallthru
        _
      %p251 = scmp.lt.s32.totalorder %s20, 2
      // Predicated region
      $region33: #{tpu_custom_call.1} parent=5 // pred_check
        %p252 = pneg %p251
      $region34: #{tpu_custom_call.1} parent=5 // pred_check_branch
        %254 = sbr.rel (%p252) target = $region36
      $region35: #{tpu_custom_call.1} parent=5 // pred_region
        // Predicated region
        $region37: #{tpu_custom_call.1} parent=35 // pred_check
          %p255 = pneg %p40
        $region38: #{tpu_custom_call.1} parent=35 // pred_check_branch
          %257 = sbr.rel (%p255) target = $region40
        $region39: #{tpu_custom_call.1} parent=35 // pred_region
          %s258 = sand.u32 %s30, 1
          %s259 = scalar_lea.sflag [#allocation3], %s258
          %s260 = sand.u32 %s30, 1
          %s261 = smul.addr %s260, 128
          %s262 = scalar_lea.vmem [#allocation2], %s261
          %s263 = smul.u32 32, %s20
          %265 = vsyncadd %s259, 0
          %s266 = smul.addr %s263, 4
          %s267 = scalar_lea.hbm %s0, %s266
          %s268 = sshll.u32 %s267, 4
          %s269 = int_to_ptr.hbm [resolvable:$true] %s268
          %s270 = sshll.u32 %s262, 4
          %s271 = int_to_ptr.vmem [resolvable:$true] %s270
          %276 = dma.hbm_to_vmem [thread:$0]  %s269, 2048, %s271, %s259, 64, 64, 4
        $region40: #{tpu_custom_call.1} parent=35 // pred_fallthru
          _
      $region36: #{tpu_custom_call.1} parent=5 // pred_fallthru
        _
      %p277 = scmp.le.s32.totalorder 1, %s20
      %p278 = scmp.lt.s32.totalorder %s20, 3
      %p279 = pnand %p277, %p278
      %p280 = pneg %p279
      // Predicated region
      $region41: #{tpu_custom_call.1} parent=5 // pred_check
        _
      $region42: #{tpu_custom_call.1} parent=5 // pred_check_branch
        %282 = sbr.rel (%p279) target = $region44
      $region43: #{tpu_custom_call.1} parent=5 // pred_region
        %s283 = ssub.s32 %s20, 1
        %s284 = sand.u32 %s33, 1
        %s285 = scalar_lea.sflag [#allocation3], %s284
        %s286 = sand.u32 %s33, 1
        %s287 = smul.addr %s286, 128
        %s288 = scalar_lea.vmem [#allocation2], %s287
        // Predicated region
        $region45: #{tpu_custom_call.1} parent=43 // pred_check
          %p289 = pneg %p46
        $region46: #{tpu_custom_call.1} parent=43 // pred_check_branch
          %291 = sbr.rel (%p289) target = $region48
        $region47: #{tpu_custom_call.1} parent=43 // pred_region
          %293 = dma.done %s285, 2048
        $region48: #{tpu_custom_call.1} parent=43 // pred_fallthru
          _
        // Predicated region
        $region49: #{tpu_custom_call.1} parent=43 // pred_check
          %p294 = pneg %p67
        $region50: #{tpu_custom_call.1} parent=43 // pred_check_branch
          %296 = sbr.rel (%p294) target = $region52
        $region51: #{tpu_custom_call.1} parent=43 // pred_region
          %298 = dma.done [#allocation6], 1024
        $region52: #{tpu_custom_call.1} parent=43 // pred_fallthru
          _
        // Predicated region
        $region53: #{tpu_custom_call.1} parent=43 // pred_check
          %p299 = pneg %p88
        $region54: #{tpu_custom_call.1} parent=43 // pred_check_branch
          %301 = sbr.rel (%p299) target = $region56
        $region55: #{tpu_custom_call.1} parent=43 // pred_region
          %303 = dma.done [#allocation6], 1024
        $region56: #{tpu_custom_call.1} parent=43 // pred_fallthru
          _
        // Predicated region
        $region57: #{tpu_custom_call.1} parent=43 // pred_check
          %p304 = pneg %p109
        $region58: #{tpu_custom_call.1} parent=43 // pred_check_branch
          %306 = sbr.rel (%p304) target = $region60
        $region59: #{tpu_custom_call.1} parent=43 // pred_region
          %308 = dma.done [#allocation9], 1024
        $region60: #{tpu_custom_call.1} parent=43 // pred_fallthru
          _
        // Predicated region
        $region61: #{tpu_custom_call.1} parent=43 // pred_check
          %p309 = pneg %p130
        $region62: #{tpu_custom_call.1} parent=43 // pred_check_branch
          %311 = sbr.rel (%p309) target = $region64
        $region63: #{tpu_custom_call.1} parent=43 // pred_region
          %313 = dma.done [#allocation9], 1024
        $region64: #{tpu_custom_call.1} parent=43 // pred_fallthru
          _
        %s314 = sand.u32 %s33, 1
        %s315 = scalar_lea.sflag [#allocation3], %s314
        %s316 = sand.u32 %s33, 1
        %s317 = smul.addr %s316, 128
        %s318 = scalar_lea.vmem [#allocation2], %s317
        %p319 = pneg %p46
        %p320 = pneg %p43
        %p321 = pneg %p67
        %p322 = pneg %p64
        %p323 = pneg %p88
        %p324 = pneg %p85
        %p325 = pneg %p109
        %p326 = pneg %p106
        %p327 = pneg %p130
        %p328 = pneg %p127
        %p329 = pneg %p151
        %p330 = pneg %p148
        %p331 = pneg %p177
        %p332 = pneg %p174
        %s333 = sand.u32 %s164, 1
        %s334 = scalar_lea.sflag [#allocation4], %s333
        %s335 = sand.u32 %s164, 1
        %s336 = smul.addr %s335, 256
        %s337 = scalar_lea.vmem [#allocation11], %s336
        %s338 = smul.u32 32, %s25
        %s339 = smul.u32 32, %s25
        %v340 = vld [vmem:[%s5] sm:$0xf]
        %v341 = vld [vmem:[%s288] sm:$0xf]
        %v342 = vld [vmem:[%s288 + $0x4] sm:$0xf]
        %v343 = vld [vmem:[%s288 + $0x8] sm:$0xf]
        %v344 = vld [vmem:[%s288 + $0xc] sm:$0xf]
        %v345 = vld [vmem:[%s288 + $0x10] sm:$0xf]
        %v346 = vld [vmem:[%s288 + $0x14] sm:$0xf]
        %v347 = vld [vmem:[%s288 + $0x18] sm:$0xf]
        %v348 = vld [vmem:[%s288 + $0x1c] sm:$0xf]
        %v349 = vld [vmem:[%s288 + $0x20] sm:$0xf]
        %v350 = vld [vmem:[%s288 + $0x24] sm:$0xf]
        %v351 = vld [vmem:[%s288 + $0x28] sm:$0xf]
        %v352 = vld [vmem:[%s288 + $0x2c] sm:$0xf]
        %v353 = vld [vmem:[%s288 + $0x30] sm:$0xf]
        %v354 = vld [vmem:[%s288 + $0x34] sm:$0xf]
        %v355 = vld [vmem:[%s288 + $0x38] sm:$0xf]
        %v356 = vld [vmem:[%s288 + $0x3c] sm:$0xf]
        %v357 = vld [vmem:[%s288 + $0x40] sm:$0xf]
        %v358 = vld [vmem:[%s288 + $0x44] sm:$0xf]
        %v359 = vld [vmem:[%s288 + $0x48] sm:$0xf]
        %v360 = vld [vmem:[%s288 + $0x4c] sm:$0xf]
        %v361 = vld [vmem:[%s288 + $0x50] sm:$0xf]
        %v362 = vld [vmem:[%s288 + $0x54] sm:$0xf]
        %v363 = vld [vmem:[%s288 + $0x58] sm:$0xf]
        %v364 = vld [vmem:[%s288 + $0x5c] sm:$0xf]
        %v365 = vld [vmem:[%s288 + $0x60] sm:$0xf]
        %v366 = vld [vmem:[%s288 + $0x64] sm:$0xf]
        %v367 = vld [vmem:[%s288 + $0x68] sm:$0xf]
        %v368 = vld [vmem:[%s288 + $0x6c] sm:$0xf]
        %v369 = vld [vmem:[%s288 + $0x70] sm:$0xf]
        %v370 = vld [vmem:[%s288 + $0x74] sm:$0xf]
        %v371 = vld [vmem:[%s288 + $0x78] sm:$0xf]
        %v372 = vld [vmem:[%s288 + $0x7c] sm:$0xf]
        %v373 = vld [vmem:[#allocation5] sm:$0xf]
        %v374 = vld [vmem:[#allocation5 + $0x4] sm:$0xf]
        %v375 = vld [vmem:[#allocation5 + $0x8] sm:$0xf]
        %v376 = vld [vmem:[#allocation5 + $0xc] sm:$0xf]
        %v377 = vld [vmem:[#allocation5 + $0x10] sm:$0xf]
        %v378 = vld [vmem:[#allocation5 + $0x14] sm:$0xf]
        %v379 = vld [vmem:[#allocation5 + $0x18] sm:$0xf]
        %v380 = vld [vmem:[#allocation5 + $0x1c] sm:$0xf]
        %v381 = vld [vmem:[#allocation5 + $0x20] sm:$0xf]
        %v382 = vld [vmem:[#allocation5 + $0x24] sm:$0xf]
        %v383 = vld [vmem:[#allocation5 + $0x28] sm:$0xf]
        %v384 = vld [vmem:[#allocation5 + $0x2c] sm:$0xf]
        %v385 = vld [vmem:[#allocation5 + $0x30] sm:$0xf]
        %v386 = vld [vmem:[#allocation5 + $0x34] sm:$0xf]
        %v387 = vld [vmem:[#allocation5 + $0x38] sm:$0xf]
        %v388 = vld [vmem:[#allocation5 + $0x3c] sm:$0xf]
        %v389 = vperm.slane %v340, 0
        %v422 = vunpack.c.l.b16 %v341
        %v423 = vunpack.c.l.b16 %v342
        %v424 = vunpack.c.l.b16 %v343
        %v425 = vunpack.c.l.b16 %v344
        %v426 = vunpack.c.l.b16 %v345
        %v427 = vunpack.c.l.b16 %v346
        %v428 = vunpack.c.l.b16 %v347
        %v429 = vunpack.c.l.b16 %v348
        %v430 = vunpack.c.l.b16 %v349
        %v431 = vunpack.c.l.b16 %v350
        %v432 = vunpack.c.l.b16 %v351
        %v433 = vunpack.c.l.b16 %v352
        %v434 = vunpack.c.l.b16 %v353
        %v435 = vunpack.c.l.b16 %v354
        %v436 = vunpack.c.l.b16 %v355
        %v437 = vunpack.c.l.b16 %v356
        %v438 = vunpack.c.l.b16 %v357
        %v439 = vunpack.c.l.b16 %v358
        %v440 = vunpack.c.l.b16 %v359
        %v441 = vunpack.c.l.b16 %v360
        %v442 = vunpack.c.l.b16 %v361
        %v443 = vunpack.c.l.b16 %v362
        %v444 = vunpack.c.l.b16 %v363
        %v445 = vunpack.c.l.b16 %v364
        %v446 = vunpack.c.l.b16 %v365
        %v447 = vunpack.c.l.b16 %v366
        %v448 = vunpack.c.l.b16 %v367
        %v449 = vunpack.c.l.b16 %v368
        %v450 = vunpack.c.l.b16 %v369
        %v451 = vunpack.c.l.b16 %v370
        %v452 = vunpack.c.l.b16 %v371
        %v453 = vunpack.c.l.b16 %v372
        %v454 = vpack.c.b16 %v423, %v422
        %v455 = vpack.c.b16 %v425, %v424
        %v456 = vpack.c.b16 %v427, %v426
        %v457 = vpack.c.b16 %v429, %v428
        %v458 = vpack.c.b16 %v431, %v430
        %v459 = vpack.c.b16 %v433, %v432
        %v460 = vpack.c.b16 %v435, %v434
        %v461 = vpack.c.b16 %v437, %v436
        %v462 = vpack.c.b16 %v439, %v438
        %v463 = vpack.c.b16 %v441, %v440
        %v464 = vpack.c.b16 %v443, %v442
        %v465 = vpack.c.b16 %v445, %v444
        %v466 = vpack.c.b16 %v447, %v446
        %v467 = vpack.c.b16 %v449, %v448
        %v468 = vpack.c.b16 %v451, %v450
        %v469 = vpack.c.b16 %v453, %v452
        %v502 = vunpack.c.l.b16 %v373
        %v503 = vunpack.c.l.b16 %v374
        %v504 = vunpack.c.l.b16 %v375
        %v505 = vunpack.c.l.b16 %v376
        %v506 = vunpack.c.l.b16 %v377
        %v507 = vunpack.c.l.b16 %v378
        %v508 = vunpack.c.l.b16 %v379
        %v509 = vunpack.c.l.b16 %v380
        %v510 = vunpack.c.l.b16 %v381
        %v511 = vunpack.c.l.b16 %v382
        %v512 = vunpack.c.l.b16 %v383
        %v513 = vunpack.c.l.b16 %v384
        %v514 = vunpack.c.l.b16 %v385
        %v515 = vunpack.c.l.b16 %v386
        %v516 = vunpack.c.l.b16 %v387
        %v517 = vunpack.c.l.b16 %v388
        %v518 = vpack.c.b16 %v503, %v502
        %v519 = vpack.c.b16 %v505, %v504
        %v520 = vpack.c.b16 %v507, %v506
        %v521 = vpack.c.b16 %v509, %v508
        %v522 = vpack.c.b16 %v511, %v510
        %v523 = vpack.c.b16 %v513, %v512
        %v524 = vpack.c.b16 %v515, %v514
        %v525 = vpack.c.b16 %v517, %v516
        %534 = vmatpush.bf16.msra.mxu0 %v525
        %535 = vmatpush.bf16.msra.mxu0 %v524
        %536 = vmatpush.bf16.msra.mxu0 %v523
        %537 = vmatpush.bf16.msra.mxu0 %v522
        %538 = vmatpush.bf16.msra.mxu0 %v521
        %539 = vmatpush.bf16.msra.mxu0 %v520
        %540 = vmatpush.bf16.msra.mxu0 %v519
        %541 = vmatpush.bf16.msra.mxu0 %v518
        %542 = vmatmul.bf16.gmra.mxu0 %v454
        %v543 = vpop.f32.mrf.mxu0
        %v544 = vadd.f32 %v389, %v543
        %v545 = vpop.f32.mrf.mxu0
        %v546 = vadd.f32 %v389, %v545
        %547 = vmatmul.bf16.gmra.mxu0 %v455
        %v548 = vpop.f32.mrf.mxu0
        %v549 = vadd.f32 %v389, %v548
        %v550 = vpop.f32.mrf.mxu0
        %v551 = vadd.f32 %v389, %v550
        %552 = vmatmul.bf16.gmra.mxu0 %v456
        %v553 = vpop.f32.mrf.mxu0
        %v554 = vadd.f32 %v389, %v553
        %v555 = vpop.f32.mrf.mxu0
        %v556 = vadd.f32 %v389, %v555
        %557 = vmatmul.bf16.gmra.mxu0 %v457
        %v558 = vpop.f32.mrf.mxu0
        %v559 = vadd.f32 %v389, %v558
        %v560 = vpop.f32.mrf.mxu0
        %v561 = vadd.f32 %v389, %v560
        %562 = vmatmul.bf16.gmra.mxu0 %v458
        %v563 = vpop.f32.mrf.mxu0
        %v564 = vadd.f32 %v389, %v563
        %v565 = vpop.f32.mrf.mxu0
        %v566 = vadd.f32 %v389, %v565
        %567 = vmatmul.bf16.gmra.mxu0 %v459
        %v568 = vpop.f32.mrf.mxu0
        %v569 = vadd.f32 %v389, %v568
        %v570 = vpop.f32.mrf.mxu0
        %v571 = vadd.f32 %v389, %v570
        %572 = vmatmul.bf16.gmra.mxu0 %v460
        %v573 = vpop.f32.mrf.mxu0
        %v574 = vadd.f32 %v389, %v573
        %v575 = vpop.f32.mrf.mxu0
        %v576 = vadd.f32 %v389, %v575
        %577 = vmatmul.bf16.gmra.mxu0 %v461
        %v578 = vpop.f32.mrf.mxu0
        %v579 = vadd.f32 %v389, %v578
        %v580 = vpop.f32.mrf.mxu0
        %v581 = vadd.f32 %v389, %v580
        %582 = vmatmul.bf16.gmra.mxu0 %v462
        %v583 = vpop.f32.mrf.mxu0
        %v584 = vadd.f32 %v389, %v583
        %v585 = vpop.f32.mrf.mxu0
        %v586 = vadd.f32 %v389, %v585
        %587 = vmatmul.bf16.gmra.mxu0 %v463
        %v588 = vpop.f32.mrf.mxu0
        %v589 = vadd.f32 %v389, %v588
        %v590 = vpop.f32.mrf.mxu0
        %v591 = vadd.f32 %v389, %v590
        %592 = vmatmul.bf16.gmra.mxu0 %v464
        %v593 = vpop.f32.mrf.mxu0
        %v594 = vadd.f32 %v389, %v593
        %v595 = vpop.f32.mrf.mxu0
        %v596 = vadd.f32 %v389, %v595
        %597 = vmatmul.bf16.gmra.mxu0 %v465
        %v598 = vpop.f32.mrf.mxu0
        %v599 = vadd.f32 %v389, %v598
        %v600 = vpop.f32.mrf.mxu0
        %v601 = vadd.f32 %v389, %v600
        %602 = vmatmul.bf16.gmra.mxu0 %v466
        %v603 = vpop.f32.mrf.mxu0
        %v604 = vadd.f32 %v389, %v603
        %v605 = vpop.f32.mrf.mxu0
        %v606 = vadd.f32 %v389, %v605
        %607 = vmatmul.bf16.gmra.mxu0 %v467
        %v608 = vpop.f32.mrf.mxu0
        %v609 = vadd.f32 %v389, %v608
        %v610 = vpop.f32.mrf.mxu0
        %v611 = vadd.f32 %v389, %v610
        %612 = vmatmul.bf16.gmra.mxu0 %v468
        %v613 = vpop.f32.mrf.mxu0
        %v614 = vadd.f32 %v389, %v613
        %v615 = vpop.f32.mrf.mxu0
        %v616 = vadd.f32 %v389, %v615
        %617 = vmatmul.bf16.gmra.mxu0 %v469
        %v618 = vpop.f32.mrf.mxu0
        %v619 = vadd.f32 %v389, %v618
        %v620 = vpop.f32.mrf.mxu0
        %v621 = vadd.f32 %v389, %v620
        %622 = vdwg.mxu0
        %v623 = vmax.f32 %v544, 0.0
        %v624 = vmax.f32 %v546, 0.0
        %v625 = vmax.f32 %v549, 0.0
        %v626 = vmax.f32 %v551, 0.0
        %v627 = vmax.f32 %v554, 0.0
        %v628 = vmax.f32 %v556, 0.0
        %v629 = vmax.f32 %v559, 0.0
        %v630 = vmax.f32 %v561, 0.0
        %v631 = vmax.f32 %v564, 0.0
        %v632 = vmax.f32 %v566, 0.0
        %v633 = vmax.f32 %v569, 0.0
        %v634 = vmax.f32 %v571, 0.0
        %v635 = vmax.f32 %v574, 0.0
        %v636 = vmax.f32 %v576, 0.0
        %v637 = vmax.f32 %v579, 0.0
        %v638 = vmax.f32 %v581, 0.0
        %v639 = vmax.f32 %v584, 0.0
        %v640 = vmax.f32 %v586, 0.0
        %v641 = vmax.f32 %v589, 0.0
        %v642 = vmax.f32 %v591, 0.0
        %v643 = vmax.f32 %v594, 0.0
        %v644 = vmax.f32 %v596, 0.0
        %v645 = vmax.f32 %v599, 0.0
        %v646 = vmax.f32 %v601, 0.0
        %v647 = vmax.f32 %v604, 0.0
        %v648 = vmax.f32 %v606, 0.0
        %v649 = vmax.f32 %v609, 0.0
        %v650 = vmax.f32 %v611, 0.0
        %v651 = vmax.f32 %v614, 0.0
        %v652 = vmax.f32 %v616, 0.0
        %v653 = vmax.f32 %v619, 0.0
        %v654 = vmax.f32 %v621, 0.0
        %v655 = vpack.c.bf16 %v624, %v623
        %v656 = vpack.c.bf16 %v626, %v625
        %v657 = vpack.c.bf16 %v628, %v627
        %v658 = vpack.c.bf16 %v630, %v629
        %v659 = vpack.c.bf16 %v632, %v631
        %v660 = vpack.c.bf16 %v634, %v633
        %v661 = vpack.c.bf16 %v636, %v635
        %v662 = vpack.c.bf16 %v638, %v637
        %v663 = vpack.c.bf16 %v640, %v639
        %v664 = vpack.c.bf16 %v642, %v641
        %v665 = vpack.c.bf16 %v644, %v643
        %v666 = vpack.c.bf16 %v646, %v645
        %v667 = vpack.c.bf16 %v648, %v647
        %v668 = vpack.c.bf16 %v650, %v649
        %v669 = vpack.c.bf16 %v652, %v651
        %v670 = vpack.c.bf16 %v654, %v653
        %v671 = vld [vmem:[#allocation7] sm:$0xf]
        %v672 = vld [vmem:[#allocation7 + $0x4] sm:$0xf]
        %v673 = vld [vmem:[#allocation7 + $0x8] sm:$0xf]
        %v674 = vld [vmem:[#allocation7 + $0xc] sm:$0xf]
        %v675 = vld [vmem:[#allocation7 + $0x10] sm:$0xf]
        %v676 = vld [vmem:[#allocation7 + $0x14] sm:$0xf]
        %v677 = vld [vmem:[#allocation7 + $0x18] sm:$0xf]
        %v678 = vld [vmem:[#allocation7 + $0x1c] sm:$0xf]
        %v679 = vld [vmem:[#allocation7 + $0x20] sm:$0xf]
        %v680 = vld [vmem:[#allocation7 + $0x24] sm:$0xf]
        %v681 = vld [vmem:[#allocation7 + $0x28] sm:$0xf]
        %v682 = vld [vmem:[#allocation7 + $0x2c] sm:$0xf]
        %v683 = vld [vmem:[#allocation7 + $0x30] sm:$0xf]
        %v684 = vld [vmem:[#allocation7 + $0x34] sm:$0xf]
        %v685 = vld [vmem:[#allocation7 + $0x38] sm:$0xf]
        %v686 = vld [vmem:[#allocation7 + $0x3c] sm:$0xf]
        %v687 = vperm.slane %v340, 1
        %v704 = vunpack.c.l.b16 %v671
        %v705 = vunpack.c.l.b16 %v672
        %v706 = vunpack.c.l.b16 %v673
        %v707 = vunpack.c.l.b16 %v674
        %v708 = vunpack.c.l.b16 %v675
        %v709 = vunpack.c.l.b16 %v676
        %v710 = vunpack.c.l.b16 %v677
        %v711 = vunpack.c.l.b16 %v678
        %v712 = vunpack.c.l.b16 %v679
        %v713 = vunpack.c.l.b16 %v680
        %v714 = vunpack.c.l.b16 %v681
        %v715 = vunpack.c.l.b16 %v682
        %v716 = vunpack.c.l.b16 %v683
        %v717 = vunpack.c.l.b16 %v684
        %v718 = vunpack.c.l.b16 %v685
        %v719 = vunpack.c.l.b16 %v686
        %v720 = vpack.c.b16 %v705, %v704
        %v721 = vpack.c.b16 %v707, %v706
        %v722 = vpack.c.b16 %v709, %v708
        %v723 = vpack.c.b16 %v711, %v710
        %v724 = vpack.c.b16 %v713, %v712
        %v725 = vpack.c.b16 %v715, %v714
        %v726 = vpack.c.b16 %v717, %v716
        %v727 = vpack.c.b16 %v719, %v718
        %736 = vmatpush.bf16.msra.mxu0 %v727
        %737 = vmatpush.bf16.msra.mxu0 %v726
        %738 = vmatpush.bf16.msra.mxu0 %v725
        %739 = vmatpush.bf16.msra.mxu0 %v724
        %740 = vmatpush.bf16.msra.mxu0 %v723
        %741 = vmatpush.bf16.msra.mxu0 %v722
        %742 = vmatpush.bf16.msra.mxu0 %v721
        %743 = vmatpush.bf16.msra.mxu0 %v720
        %744 = vmatmul.bf16.gmra.mxu0 %v655
        %v745 = vpop.f32.mrf.mxu0
        %v746 = vadd.f32 %v687, %v745
        %v747 = vpop.f32.mrf.mxu0
        %v748 = vadd.f32 %v687, %v747
        %749 = vmatmul.bf16.gmra.mxu0 %v656
        %v750 = vpop.f32.mrf.mxu0
        %v751 = vadd.f32 %v687, %v750
        %v752 = vpop.f32.mrf.mxu0
        %v753 = vadd.f32 %v687, %v752
        %754 = vmatmul.bf16.gmra.mxu0 %v657
        %v755 = vpop.f32.mrf.mxu0
        %v756 = vadd.f32 %v687, %v755
        %v757 = vpop.f32.mrf.mxu0
        %v758 = vadd.f32 %v687, %v757
        %759 = vmatmul.bf16.gmra.mxu0 %v658
        %v760 = vpop.f32.mrf.mxu0
        %v761 = vadd.f32 %v687, %v760
        %v762 = vpop.f32.mrf.mxu0
        %v763 = vadd.f32 %v687, %v762
        %764 = vmatmul.bf16.gmra.mxu0 %v659
        %v765 = vpop.f32.mrf.mxu0
        %v766 = vadd.f32 %v687, %v765
        %v767 = vpop.f32.mrf.mxu0
        %v768 = vadd.f32 %v687, %v767
        %769 = vmatmul.bf16.gmra.mxu0 %v660
        %v770 = vpop.f32.mrf.mxu0
        %v771 = vadd.f32 %v687, %v770
        %v772 = vpop.f32.mrf.mxu0
        %v773 = vadd.f32 %v687, %v772
        %774 = vmatmul.bf16.gmra.mxu0 %v661
        %v775 = vpop.f32.mrf.mxu0
        %v776 = vadd.f32 %v687, %v775
        %v777 = vpop.f32.mrf.mxu0
        %v778 = vadd.f32 %v687, %v777
        %779 = vmatmul.bf16.gmra.mxu0 %v662
        %v780 = vpop.f32.mrf.mxu0
        %v781 = vadd.f32 %v687, %v780
        %v782 = vpop.f32.mrf.mxu0
        %v783 = vadd.f32 %v687, %v782
        %784 = vmatmul.bf16.gmra.mxu0 %v663
        %v785 = vpop.f32.mrf.mxu0
        %v786 = vadd.f32 %v687, %v785
        %v787 = vpop.f32.mrf.mxu0
        %v788 = vadd.f32 %v687, %v787
        %789 = vmatmul.bf16.gmra.mxu0 %v664
        %v790 = vpop.f32.mrf.mxu0
        %v791 = vadd.f32 %v687, %v790
        %v792 = vpop.f32.mrf.mxu0
        %v793 = vadd.f32 %v687, %v792
        %794 = vmatmul.bf16.gmra.mxu0 %v665
        %v795 = vpop.f32.mrf.mxu0
        %v796 = vadd.f32 %v687, %v795
        %v797 = vpop.f32.mrf.mxu0
        %v798 = vadd.f32 %v687, %v797
        %799 = vmatmul.bf16.gmra.mxu0 %v666
        %v800 = vpop.f32.mrf.mxu0
        %v801 = vadd.f32 %v687, %v800
        %v802 = vpop.f32.mrf.mxu0
        %v803 = vadd.f32 %v687, %v802
        %804 = vmatmul.bf16.gmra.mxu0 %v667
        %v805 = vpop.f32.mrf.mxu0
        %v806 = vadd.f32 %v687, %v805
        %v807 = vpop.f32.mrf.mxu0
        %v808 = vadd.f32 %v687, %v807
        %809 = vmatmul.bf16.gmra.mxu0 %v668
        %v810 = vpop.f32.mrf.mxu0
        %v811 = vadd.f32 %v687, %v810
        %v812 = vpop.f32.mrf.mxu0
        %v813 = vadd.f32 %v687, %v812
        %814 = vmatmul.bf16.gmra.mxu0 %v669
        %v815 = vpop.f32.mrf.mxu0
        %v816 = vadd.f32 %v687, %v815
        %v817 = vpop.f32.mrf.mxu0
        %v818 = vadd.f32 %v687, %v817
        %819 = vmatmul.bf16.gmra.mxu0 %v670
        %v820 = vpop.f32.mrf.mxu0
        %v821 = vadd.f32 %v687, %v820
        %v822 = vpop.f32.mrf.mxu0
        %v823 = vadd.f32 %v687, %v822
        %824 = vdwg.mxu0
        %v825 = vmax.f32 %v746, 0.0
        %v826 = vmax.f32 %v748, 0.0
        %v827 = vmax.f32 %v751, 0.0
        %v828 = vmax.f32 %v753, 0.0
        %v829 = vmax.f32 %v756, 0.0
        %v830 = vmax.f32 %v758, 0.0
        %v831 = vmax.f32 %v761, 0.0
        %v832 = vmax.f32 %v763, 0.0
        %v833 = vmax.f32 %v766, 0.0
        %v834 = vmax.f32 %v768, 0.0
        %v835 = vmax.f32 %v771, 0.0
        %v836 = vmax.f32 %v773, 0.0
        %v837 = vmax.f32 %v776, 0.0
        %v838 = vmax.f32 %v778, 0.0
        %v839 = vmax.f32 %v781, 0.0
        %v840 = vmax.f32 %v783, 0.0
        %v841 = vmax.f32 %v786, 0.0
        %v842 = vmax.f32 %v788, 0.0
        %v843 = vmax.f32 %v791, 0.0
        %v844 = vmax.f32 %v793, 0.0
        %v845 = vmax.f32 %v796, 0.0
        %v846 = vmax.f32 %v798, 0.0
        %v847 = vmax.f32 %v801, 0.0
        %v848 = vmax.f32 %v803, 0.0
        %v849 = vmax.f32 %v806, 0.0
        %v850 = vmax.f32 %v808, 0.0
        %v851 = vmax.f32 %v811, 0.0
        %v852 = vmax.f32 %v813, 0.0
        %v853 = vmax.f32 %v816, 0.0
        %v854 = vmax.f32 %v818, 0.0
        %v855 = vmax.f32 %v821, 0.0
        %v856 = vmax.f32 %v823, 0.0
        %v857 = vpack.c.bf16 %v826, %v825
        %v858 = vpack.c.bf16 %v828, %v827
        %v859 = vpack.c.bf16 %v830, %v829
        %v860 = vpack.c.bf16 %v832, %v831
        %v861 = vpack.c.bf16 %v834, %v833
        %v862 = vpack.c.bf16 %v836, %v835
        %v863 = vpack.c.bf16 %v838, %v837
        %v864 = vpack.c.bf16 %v840, %v839
        %v865 = vpack.c.bf16 %v842, %v841
        %v866 = vpack.c.bf16 %v844, %v843
        %v867 = vpack.c.bf16 %v846, %v845
        %v868 = vpack.c.bf16 %v848, %v847
        %v869 = vpack.c.bf16 %v850, %v849
        %v870 = vpack.c.bf16 %v852, %v851
        %v871 = vpack.c.bf16 %v854, %v853
        %v872 = vpack.c.bf16 %v856, %v855
        %v873 = vld [vmem:[#allocation8] sm:$0xf]
        %v874 = vld [vmem:[#allocation8 + $0x4] sm:$0xf]
        %v875 = vld [vmem:[#allocation8 + $0x8] sm:$0xf]
        %v876 = vld [vmem:[#allocation8 + $0xc] sm:$0xf]
        %v877 = vld [vmem:[#allocation8 + $0x10] sm:$0xf]
        %v878 = vld [vmem:[#allocation8 + $0x14] sm:$0xf]
        %v879 = vld [vmem:[#allocation8 + $0x18] sm:$0xf]
        %v880 = vld [vmem:[#allocation8 + $0x1c] sm:$0xf]
        %v881 = vld [vmem:[#allocation8 + $0x20] sm:$0xf]
        %v882 = vld [vmem:[#allocation8 + $0x24] sm:$0xf]
        %v883 = vld [vmem:[#allocation8 + $0x28] sm:$0xf]
        %v884 = vld [vmem:[#allocation8 + $0x2c] sm:$0xf]
        %v885 = vld [vmem:[#allocation8 + $0x30] sm:$0xf]
        %v886 = vld [vmem:[#allocation8 + $0x34] sm:$0xf]
        %v887 = vld [vmem:[#allocation8 + $0x38] sm:$0xf]
        %v888 = vld [vmem:[#allocation8 + $0x3c] sm:$0xf]
        %v889 = vperm.slane %v340, 2
        %v906 = vunpack.c.l.b16 %v873
        %v907 = vunpack.c.l.b16 %v874
        %v908 = vunpack.c.l.b16 %v875
        %v909 = vunpack.c.l.b16 %v876
        %v910 = vunpack.c.l.b16 %v877
        %v911 = vunpack.c.l.b16 %v878
        %v912 = vunpack.c.l.b16 %v879
        %v913 = vunpack.c.l.b16 %v880
        %v914 = vunpack.c.l.b16 %v881
        %v915 = vunpack.c.l.b16 %v882
        %v916 = vunpack.c.l.b16 %v883
        %v917 = vunpack.c.l.b16 %v884
        %v918 = vunpack.c.l.b16 %v885
        %v919 = vunpack.c.l.b16 %v886
        %v920 = vunpack.c.l.b16 %v887
        %v921 = vunpack.c.l.b16 %v888
        %v922 = vpack.c.b16 %v907, %v906
        %v923 = vpack.c.b16 %v909, %v908
        %v924 = vpack.c.b16 %v911, %v910
        %v925 = vpack.c.b16 %v913, %v912
        %v926 = vpack.c.b16 %v915, %v914
        %v927 = vpack.c.b16 %v917, %v916
        %v928 = vpack.c.b16 %v919, %v918
        %v929 = vpack.c.b16 %v921, %v920
        %938 = vmatpush.bf16.msra.mxu0 %v929
        %939 = vmatpush.bf16.msra.mxu0 %v928
        %940 = vmatpush.bf16.msra.mxu0 %v927
        %941 = vmatpush.bf16.msra.mxu0 %v926
        %942 = vmatpush.bf16.msra.mxu0 %v925
        %943 = vmatpush.bf16.msra.mxu0 %v924
        %944 = vmatpush.bf16.msra.mxu0 %v923
        %945 = vmatpush.bf16.msra.mxu0 %v922
        %946 = vmatmul.bf16.gmra.mxu0 %v857
        %v947 = vpop.f32.mrf.mxu0
        %v948 = vadd.f32 %v889, %v947
        %v949 = vpop.f32.mrf.mxu0
        %v950 = vadd.f32 %v889, %v949
        %951 = vmatmul.bf16.gmra.mxu0 %v858
        %v952 = vpop.f32.mrf.mxu0
        %v953 = vadd.f32 %v889, %v952
        %v954 = vpop.f32.mrf.mxu0
        %v955 = vadd.f32 %v889, %v954
        %956 = vmatmul.bf16.gmra.mxu0 %v859
        %v957 = vpop.f32.mrf.mxu0
        %v958 = vadd.f32 %v889, %v957
        %v959 = vpop.f32.mrf.mxu0
        %v960 = vadd.f32 %v889, %v959
        %961 = vmatmul.bf16.gmra.mxu0 %v860
        %v962 = vpop.f32.mrf.mxu0
        %v963 = vadd.f32 %v889, %v962
        %v964 = vpop.f32.mrf.mxu0
        %v965 = vadd.f32 %v889, %v964
        %966 = vmatmul.bf16.gmra.mxu0 %v861
        %v967 = vpop.f32.mrf.mxu0
        %v968 = vadd.f32 %v889, %v967
        %v969 = vpop.f32.mrf.mxu0
        %v970 = vadd.f32 %v889, %v969
        %971 = vmatmul.bf16.gmra.mxu0 %v862
        %v972 = vpop.f32.mrf.mxu0
        %v973 = vadd.f32 %v889, %v972
        %v974 = vpop.f32.mrf.mxu0
        %v975 = vadd.f32 %v889, %v974
        %976 = vmatmul.bf16.gmra.mxu0 %v863
        %v977 = vpop.f32.mrf.mxu0
        %v978 = vadd.f32 %v889, %v977
        %v979 = vpop.f32.mrf.mxu0
        %v980 = vadd.f32 %v889, %v979
        %981 = vmatmul.bf16.gmra.mxu0 %v864
        %v982 = vpop.f32.mrf.mxu0
        %v983 = vadd.f32 %v889, %v982
        %v984 = vpop.f32.mrf.mxu0
        %v985 = vadd.f32 %v889, %v984
        %986 = vmatmul.bf16.gmra.mxu0 %v865
        %v987 = vpop.f32.mrf.mxu0
        %v988 = vadd.f32 %v889, %v987
        %v989 = vpop.f32.mrf.mxu0
        %v990 = vadd.f32 %v889, %v989
        %991 = vmatmul.bf16.gmra.mxu0 %v866
        %v992 = vpop.f32.mrf.mxu0
        %v993 = vadd.f32 %v889, %v992
        %v994 = vpop.f32.mrf.mxu0
        %v995 = vadd.f32 %v889, %v994
        %996 = vmatmul.bf16.gmra.mxu0 %v867
        %v997 = vpop.f32.mrf.mxu0
        %v998 = vadd.f32 %v889, %v997
        %v999 = vpop.f32.mrf.mxu0
        %v1000 = vadd.f32 %v889, %v999
        %1001 = vmatmul.bf16.gmra.mxu0 %v868
        %v1002 = vpop.f32.mrf.mxu0
        %v1003 = vadd.f32 %v889, %v1002
        %v1004 = vpop.f32.mrf.mxu0
        %v1005 = vadd.f32 %v889, %v1004
        %1006 = vmatmul.bf16.gmra.mxu0 %v869
        %v1007 = vpop.f32.mrf.mxu0
        %v1008 = vadd.f32 %v889, %v1007
        %v1009 = vpop.f32.mrf.mxu0
        %v1010 = vadd.f32 %v889, %v1009
        %1011 = vmatmul.bf16.gmra.mxu0 %v870
        %v1012 = vpop.f32.mrf.mxu0
        %v1013 = vadd.f32 %v889, %v1012
        %v1014 = vpop.f32.mrf.mxu0
        %v1015 = vadd.f32 %v889, %v1014
        %1016 = vmatmul.bf16.gmra.mxu0 %v871
        %v1017 = vpop.f32.mrf.mxu0
        %v1018 = vadd.f32 %v889, %v1017
        %v1019 = vpop.f32.mrf.mxu0
        %v1020 = vadd.f32 %v889, %v1019
        %1021 = vmatmul.bf16.gmra.mxu0 %v872
        %v1022 = vpop.f32.mrf.mxu0
        %v1023 = vadd.f32 %v889, %v1022
        %v1024 = vpop.f32.mrf.mxu0
        %v1025 = vadd.f32 %v889, %v1024
        %1026 = vdwg.mxu0
        %v1027 = vmax.f32 %v948, 0.0
        %v1028 = vmax.f32 %v950, 0.0
        %v1029 = vmax.f32 %v953, 0.0
        %v1030 = vmax.f32 %v955, 0.0
        %v1031 = vmax.f32 %v958, 0.0
        %v1032 = vmax.f32 %v960, 0.0
        %v1033 = vmax.f32 %v963, 0.0
        %v1034 = vmax.f32 %v965, 0.0
        %v1035 = vmax.f32 %v968, 0.0
        %v1036 = vmax.f32 %v970, 0.0
        %v1037 = vmax.f32 %v973, 0.0
        %v1038 = vmax.f32 %v975, 0.0
        %v1039 = vmax.f32 %v978, 0.0
        %v1040 = vmax.f32 %v980, 0.0
        %v1041 = vmax.f32 %v983, 0.0
        %v1042 = vmax.f32 %v985, 0.0
        %v1043 = vmax.f32 %v988, 0.0
        %v1044 = vmax.f32 %v990, 0.0
        %v1045 = vmax.f32 %v993, 0.0
        %v1046 = vmax.f32 %v995, 0.0
        %v1047 = vmax.f32 %v998, 0.0
        %v1048 = vmax.f32 %v1000, 0.0
        %v1049 = vmax.f32 %v1003, 0.0
        %v1050 = vmax.f32 %v1005, 0.0
        %v1051 = vmax.f32 %v1008, 0.0
        %v1052 = vmax.f32 %v1010, 0.0
        %v1053 = vmax.f32 %v1013, 0.0
        %v1054 = vmax.f32 %v1015, 0.0
        %v1055 = vmax.f32 %v1018, 0.0
        %v1056 = vmax.f32 %v1020, 0.0
        %v1057 = vmax.f32 %v1023, 0.0
        %v1058 = vmax.f32 %v1025, 0.0
        %v1059 = vpack.c.bf16 %v1028, %v1027
        %v1060 = vpack.c.bf16 %v1030, %v1029
        %v1061 = vpack.c.bf16 %v1032, %v1031
        %v1062 = vpack.c.bf16 %v1034, %v1033
        %v1063 = vpack.c.bf16 %v1036, %v1035
        %v1064 = vpack.c.bf16 %v1038, %v1037
        %v1065 = vpack.c.bf16 %v1040, %v1039
        %v1066 = vpack.c.bf16 %v1042, %v1041
        %v1067 = vpack.c.bf16 %v1044, %v1043
        %v1068 = vpack.c.bf16 %v1046, %v1045
        %v1069 = vpack.c.bf16 %v1048, %v1047
        %v1070 = vpack.c.bf16 %v1050, %v1049
        %v1071 = vpack.c.bf16 %v1052, %v1051
        %v1072 = vpack.c.bf16 %v1054, %v1053
        %v1073 = vpack.c.bf16 %v1056, %v1055
        %v1074 = vpack.c.bf16 %v1058, %v1057
        %v1075 = vld [vmem:[#allocation10] sm:$0xf]
        %v1076 = vld [vmem:[#allocation10 + $0x4] sm:$0xf]
        %v1077 = vld [vmem:[#allocation10 + $0x8] sm:$0xf]
        %v1078 = vld [vmem:[#allocation10 + $0xc] sm:$0xf]
        %v1079 = vld [vmem:[#allocation10 + $0x10] sm:$0xf]
        %v1080 = vld [vmem:[#allocation10 + $0x14] sm:$0xf]
        %v1081 = vld [vmem:[#allocation10 + $0x18] sm:$0xf]
        %v1082 = vld [vmem:[#allocation10 + $0x1c] sm:$0xf]
        %v1083 = vld [vmem:[#allocation10 + $0x20] sm:$0xf]
        %v1084 = vld [vmem:[#allocation10 + $0x24] sm:$0xf]
        %v1085 = vld [vmem:[#allocation10 + $0x28] sm:$0xf]
        %v1086 = vld [vmem:[#allocation10 + $0x2c] sm:$0xf]
        %v1087 = vld [vmem:[#allocation10 + $0x30] sm:$0xf]
        %v1088 = vld [vmem:[#allocation10 + $0x34] sm:$0xf]
        %v1089 = vld [vmem:[#allocation10 + $0x38] sm:$0xf]
        %v1090 = vld [vmem:[#allocation10 + $0x3c] sm:$0xf]
        %v1091 = vperm.slane %v340, 3
        %v1108 = vunpack.c.l.b16 %v1075
        %v1109 = vunpack.c.l.b16 %v1076
        %v1110 = vunpack.c.l.b16 %v1077
        %v1111 = vunpack.c.l.b16 %v1078
        %v1112 = vunpack.c.l.b16 %v1079
        %v1113 = vunpack.c.l.b16 %v1080
        %v1114 = vunpack.c.l.b16 %v1081
        %v1115 = vunpack.c.l.b16 %v1082
        %v1116 = vunpack.c.l.b16 %v1083
        %v1117 = vunpack.c.l.b16 %v1084
        %v1118 = vunpack.c.l.b16 %v1085
        %v1119 = vunpack.c.l.b16 %v1086
        %v1120 = vunpack.c.l.b16 %v1087
        %v1121 = vunpack.c.l.b16 %v1088
        %v1122 = vunpack.c.l.b16 %v1089
        %v1123 = vunpack.c.l.b16 %v1090
        %v1124 = vpack.c.b16 %v1109, %v1108
        %v1125 = vpack.c.b16 %v1111, %v1110
        %v1126 = vpack.c.b16 %v1113, %v1112
        %v1127 = vpack.c.b16 %v1115, %v1114
        %v1128 = vpack.c.b16 %v1117, %v1116
        %v1129 = vpack.c.b16 %v1119, %v1118
        %v1130 = vpack.c.b16 %v1121, %v1120
        %v1131 = vpack.c.b16 %v1123, %v1122
        %1140 = vmatpush.bf16.msra.mxu0 %v1131
        %1141 = vmatpush.bf16.msra.mxu0 %v1130
        %1142 = vmatpush.bf16.msra.mxu0 %v1129
        %1143 = vmatpush.bf16.msra.mxu0 %v1128
        %1144 = vmatpush.bf16.msra.mxu0 %v1127
        %1145 = vmatpush.bf16.msra.mxu0 %v1126
        %1146 = vmatpush.bf16.msra.mxu0 %v1125
        %1147 = vmatpush.bf16.msra.mxu0 %v1124
        %1148 = vmatmul.bf16.gmra.mxu0 %v1059
        %v1149 = vpop.f32.mrf.mxu0
        %v1150 = vadd.f32 %v1091, %v1149
        %v1151 = vpop.f32.mrf.mxu0
        %v1152 = vadd.f32 %v1091, %v1151
        %1153 = vmatmul.bf16.gmra.mxu0 %v1060
        %v1154 = vpop.f32.mrf.mxu0
        %v1155 = vadd.f32 %v1091, %v1154
        %v1156 = vpop.f32.mrf.mxu0
        %v1157 = vadd.f32 %v1091, %v1156
        %1158 = vmatmul.bf16.gmra.mxu0 %v1061
        %v1159 = vpop.f32.mrf.mxu0
        %v1160 = vadd.f32 %v1091, %v1159
        %v1161 = vpop.f32.mrf.mxu0
        %v1162 = vadd.f32 %v1091, %v1161
        %1163 = vmatmul.bf16.gmra.mxu0 %v1062
        %v1164 = vpop.f32.mrf.mxu0
        %v1165 = vadd.f32 %v1091, %v1164
        %v1166 = vpop.f32.mrf.mxu0
        %v1167 = vadd.f32 %v1091, %v1166
        %1168 = vmatmul.bf16.gmra.mxu0 %v1063
        %v1169 = vpop.f32.mrf.mxu0
        %v1170 = vadd.f32 %v1091, %v1169
        %v1171 = vpop.f32.mrf.mxu0
        %v1172 = vadd.f32 %v1091, %v1171
        %1173 = vmatmul.bf16.gmra.mxu0 %v1064
        %v1174 = vpop.f32.mrf.mxu0
        %v1175 = vadd.f32 %v1091, %v1174
        %v1176 = vpop.f32.mrf.mxu0
        %v1177 = vadd.f32 %v1091, %v1176
        %1178 = vmatmul.bf16.gmra.mxu0 %v1065
        %v1179 = vpop.f32.mrf.mxu0
        %v1180 = vadd.f32 %v1091, %v1179
        %v1181 = vpop.f32.mrf.mxu0
        %v1182 = vadd.f32 %v1091, %v1181
        %1183 = vmatmul.bf16.gmra.mxu0 %v1066
        %v1184 = vpop.f32.mrf.mxu0
        %v1185 = vadd.f32 %v1091, %v1184
        %v1186 = vpop.f32.mrf.mxu0
        %v1187 = vadd.f32 %v1091, %v1186
        %1188 = vmatmul.bf16.gmra.mxu0 %v1067
        %v1189 = vpop.f32.mrf.mxu0
        %v1190 = vadd.f32 %v1091, %v1189
        %v1191 = vpop.f32.mrf.mxu0
        %v1192 = vadd.f32 %v1091, %v1191
        %1193 = vmatmul.bf16.gmra.mxu0 %v1068
        %v1194 = vpop.f32.mrf.mxu0
        %v1195 = vadd.f32 %v1091, %v1194
        %v1196 = vpop.f32.mrf.mxu0
        %v1197 = vadd.f32 %v1091, %v1196
        %1198 = vmatmul.bf16.gmra.mxu0 %v1069
        %v1199 = vpop.f32.mrf.mxu0
        %v1200 = vadd.f32 %v1091, %v1199
        %v1201 = vpop.f32.mrf.mxu0
        %v1202 = vadd.f32 %v1091, %v1201
        %1203 = vmatmul.bf16.gmra.mxu0 %v1070
        %v1204 = vpop.f32.mrf.mxu0
        %v1205 = vadd.f32 %v1091, %v1204
        %v1206 = vpop.f32.mrf.mxu0
        %v1207 = vadd.f32 %v1091, %v1206
        %1208 = vmatmul.bf16.gmra.mxu0 %v1071
        %v1209 = vpop.f32.mrf.mxu0
        %v1210 = vadd.f32 %v1091, %v1209
        %v1211 = vpop.f32.mrf.mxu0
        %v1212 = vadd.f32 %v1091, %v1211
        %1213 = vmatmul.bf16.gmra.mxu0 %v1072
        %v1214 = vpop.f32.mrf.mxu0
        %v1215 = vadd.f32 %v1091, %v1214
        %v1216 = vpop.f32.mrf.mxu0
        %v1217 = vadd.f32 %v1091, %v1216
        %1218 = vmatmul.bf16.gmra.mxu0 %v1073
        %v1219 = vpop.f32.mrf.mxu0
        %v1220 = vadd.f32 %v1091, %v1219
        %v1221 = vpop.f32.mrf.mxu0
        %v1222 = vadd.f32 %v1091, %v1221
        %1223 = vmatmul.bf16.gmra.mxu0 %v1074
        %v1224 = vpop.f32.mrf.mxu0
        %v1225 = vadd.f32 %v1091, %v1224
        %v1226 = vpop.f32.mrf.mxu0
        %v1227 = vadd.f32 %v1091, %v1226
        %1228 = vdwg.mxu0
        %1229 = vst [vmem:[%s337] sm:$0xff] %v1150
        %1230 = vst [vmem:[%s337 + $0x8] sm:$0xff] %v1152
        %1231 = vst [vmem:[%s337 + $0x10] sm:$0xff] %v1155
        %1232 = vst [vmem:[%s337 + $0x18] sm:$0xff] %v1157
        %1233 = vst [vmem:[%s337 + $0x20] sm:$0xff] %v1160
        %1234 = vst [vmem:[%s337 + $0x28] sm:$0xff] %v1162
        %1235 = vst [vmem:[%s337 + $0x30] sm:$0xff] %v1165
        %1236 = vst [vmem:[%s337 + $0x38] sm:$0xff] %v1167
        %1237 = vst [vmem:[%s337 + $0x40] sm:$0xff] %v1170
        %1238 = vst [vmem:[%s337 + $0x48] sm:$0xff] %v1172
        %1239 = vst [vmem:[%s337 + $0x50] sm:$0xff] %v1175
        %1240 = vst [vmem:[%s337 + $0x58] sm:$0xff] %v1177
        %1241 = vst [vmem:[%s337 + $0x60] sm:$0xff] %v1180
        %1242 = vst [vmem:[%s337 + $0x68] sm:$0xff] %v1182
        %1243 = vst [vmem:[%s337 + $0x70] sm:$0xff] %v1185
        %1244 = vst [vmem:[%s337 + $0x78] sm:$0xff] %v1187
        %1245 = vst [vmem:[%s337 + $0x80] sm:$0xff] %v1190
        %1246 = vst [vmem:[%s337 + $0x88] sm:$0xff] %v1192
        %1247 = vst [vmem:[%s337 + $0x90] sm:$0xff] %v1195
        %1248 = vst [vmem:[%s337 + $0x98] sm:$0xff] %v1197
        %1249 = vst [vmem:[%s337 + $0xa0] sm:$0xff] %v1200
        %1250 = vst [vmem:[%s337 + $0xa8] sm:$0xff] %v1202
        %1251 = vst [vmem:[%s337 + $0xb0] sm:$0xff] %v1205
        %1252 = vst [vmem:[%s337 + $0xb8] sm:$0xff] %v1207
        %1253 = vst [vmem:[%s337 + $0xc0] sm:$0xff] %v1210
        %1254 = vst [vmem:[%s337 + $0xc8] sm:$0xff] %v1212
        %1255 = vst [vmem:[%s337 + $0xd0] sm:$0xff] %v1215
        %1256 = vst [vmem:[%s337 + $0xd8] sm:$0xff] %v1217
        %1257 = vst [vmem:[%s337 + $0xe0] sm:$0xff] %v1220
        %1258 = vst [vmem:[%s337 + $0xe8] sm:$0xff] %v1222
        %1259 = vst [vmem:[%s337 + $0xf0] sm:$0xff] %v1225
        %1260 = vst [vmem:[%s337 + $0xf8] sm:$0xff] %v1227
        %s1261 = sand.u32 %s164, 1
        %s1262 = scalar_lea.sflag [#allocation4], %s1261
        %s1263 = sand.u32 %s164, 1
        %s1264 = smul.addr %s1263, 256
        %s1265 = scalar_lea.vmem [#allocation11], %s1264
        // Predicated region
        $region65: #{tpu_custom_call.1} parent=43 // pred_check
          %p1266 = pneg %p174
        $region66: #{tpu_custom_call.1} parent=43 // pred_check_branch
          %1268 = sbr.rel (%p1266) target = $region68
        $region67: #{tpu_custom_call.1} parent=43 // pred_region
          %s1269 = smul.u32 32, %s25
          %1271 = vsyncadd %s1262, 0
          %s1272 = smul.addr %s1269, 8
          %s1273 = scalar_lea.hbm %s6, %s1272
          %s1274 = sshll.u32 %s1265, 4
          %s1275 = int_to_ptr.vmem [resolvable:$true] %s1274
          %s1276 = sshll.u32 %s1273, 4
          %s1277 = int_to_ptr.hbm [resolvable:$true] %s1276
          %1282 = dma.vmem_to_hbm [thread:$0]  %s1275, 4096, %s1277, %s1262, 128, 128, 8
        $region68: #{tpu_custom_call.1} parent=43 // pred_fallthru
          _
      $region44: #{tpu_custom_call.1} parent=5 // pred_fallthru
        _
      %p1283 = scmp.le.s32.totalorder 2, %s20
      // Predicated region
      $region69: #{tpu_custom_call.1} parent=5 // pred_check
        %p1284 = pneg %p1283
      $region70: #{tpu_custom_call.1} parent=5 // pred_check_branch
        %1286 = sbr.rel (%p1284) target = $region72
      $region71: #{tpu_custom_call.1} parent=5 // pred_region
        %s1287 = ssub.s32 %s20, 2
        // Predicated region
        $region73: #{tpu_custom_call.1} parent=71 // pred_check
          %p1288 = pneg %p180
        $region74: #{tpu_custom_call.1} parent=71 // pred_check_branch
          %1290 = sbr.rel (%p1288) target = $region76
        $region75: #{tpu_custom_call.1} parent=71 // pred_region
          %s1291 = sand.u32 %s165, 1
          %s1292 = scalar_lea.sflag [#allocation4], %s1291
          %s1293 = sand.u32 %s165, 1
          %s1294 = smul.addr %s1293, 256
          %s1295 = scalar_lea.vmem [#allocation11], %s1294
          %1297 = dma.done %s1292, 4096
        $region76: #{tpu_custom_call.1} parent=71 // pred_fallthru
          _
      $region72: #{tpu_custom_call.1} parent=5 // pred_fallthru
        _
    $region6: #{tpu_custom_call.1} parent=1 // loop_footer
      %s24 = sadd.s32 1, %s20
    $region7: #{tpu_custom_call.1} parent=1 // loop_footer_branch
      %19 = sbr.rel target = $region3
    $region8: #{tpu_custom_call.1} parent=1 // loop_exit
      _
    %1298 = vsyncpa [#allocation3], 1
    %s1299 = scalar_lea.sflag [#allocation3], 1
    %1300 = vsyncpa %s1299, 1
    %1301 = vsyncpa [#allocation6], 1
    %1302 = vsyncpa [#allocation9], 1
    %1303 = vsyncpa [#allocation4], 1
    %s1304 = scalar_lea.sflag [#allocation4], 1
    %1305 = vsyncpa %s1304, 1

</llo_original>
